<compile_context>
chip_gen: v6e
topology: v6e:2x2x1
jax: 0.10.0
libtpu: 0.0.40
codegen_flags: <defaults>
</compile_context>

<pallas_src>
import numpy as np
import jax
import jax.numpy as jnp
from jax.experimental import pallas as pl
from jax.experimental.pallas import tpu as pltpu


def _row_logsumexp(a):
    m = jnp.max(a, axis=1, keepdims=True)
    return m + jnp.log(jnp.sum(jnp.exp(a - m), axis=1, keepdims=True))


# ----------------------------------------------------------------------------
# Fused kernel: decoder stand-in + adaptive log-softmax (log_probs)
# ----------------------------------------------------------------------------
def make_fused_kernel(shortlist, n_clusters, oszs, tile_t, batch, d_model,
                      n_symbols, v_pad):
    head_size = shortlist + n_clusters
    tile_n = tile_t * batch

    def kernel(latent_ref, wd_ref, pos_ref, wcomb_ref, out_ref):
        # ---- decoder (StrataVAD stand-in): x = tanh(latent @ Wd + pos) -----
        # latent has only B rows: one tiny matmul, broadcast across the T tile.
        h = jnp.dot(latent_ref[...].astype(jnp.bfloat16), wd_ref[...],
                    preferred_element_type=jnp.float32)            # (B, D) f32
        x = jnp.tanh(pos_ref[...][:, None, :] + h[None, :, :])      # (tile_t, B, D)
        # row r of x2 corresponds to (t = r // B, b = r % B), matching the
        # PyTorch (T, B, D).view(-1, D) flattening.
        x2 = x.reshape(tile_n, d_model)

        # ---- single merged matmul: [head | W1_0@W2_0 | W1_1@W2_1 | ...] ----
        logits = jnp.dot(x2.astype(jnp.bfloat16), wcomb_ref[...],
                         preferred_element_type=jnp.float32)        # (tile_n, head+Σosz)

        head_lp = logits[:, :head_size]
        head_lp = head_lp - _row_logsumexp(head_lp)                 # log_softmax(head)

        # ---- assemble full padded output rows in registers, store once ----
        parts = [head_lp[:, :shortlist]]
        off = head_size
        for i in range(n_clusters):
            cl = logits[:, off:off + oszs[i]]
            off += oszs[i]
            clp = cl - _row_logsumexp(cl)                           # log_softmax(cluster_i)
            parts.append(clp + head_lp[:, shortlist + i:shortlist + i + 1])
        if v_pad > n_symbols:
            # pad lanes are discarded by the wrapper slice; zeros keep them
            # deterministic.
            parts.append(jnp.zeros((tile_n, v_pad - n_symbols), jnp.float32))
        out_ref[...] = jnp.concatenate(parts, axis=1)               # one full-width store

    return kernel


# ----------------------------------------------------------------------------
# Parameter init (shapes follow AdaptiveLogSoftmaxWithLoss with div_value=4:
# head = Linear(D, cutoffs[0] + n_clusters, bias=False),
# tail[i] = Linear(D, D // 4**(i+1), bias=False) -> Linear(., osz_i, bias=False))
# ----------------------------------------------------------------------------
def init_params(key, n_symbols, cutoffs, latent_dim, d_model_last, seq_len,
                div_value=4):
    D = d_model_last
    n_clusters = len(cutoffs)
    keys = jax.random.split(key, 3 + n_clusters)
    wd = jax.random.normal(keys[0], (latent_dim, D), jnp.float32) / np.sqrt(latent_dim)
    pos = jax.random.normal(keys[1], (seq_len, D), jnp.float32) * 0.02
    head_size = cutoffs[0] + n_clusters
    head_w = jax.random.normal(keys[2], (D, head_size), jnp.float32) / np.sqrt(D)
    bounds = list(cutoffs) + [n_symbols]
    tails = []
    for i in range(n_clusters):
        hsz = D // (div_value ** (i + 1))
        osz = bounds[i + 1] - bounds[i]
        k1, k2 = jax.random.split(keys[3 + i])
        w1 = jax.random.normal(k1, (D, hsz), jnp.float32) / np.sqrt(D)
        w2 = jax.random.normal(k2, (hsz, osz), jnp.float32) / np.sqrt(hsz)
        tails.append((w1, w2))
    return dict(wd=wd, pos=pos, head_w=head_w, tails=tails)


def prepare_params(params):
    """One-time preprocessing hoisted out of forward:
    fold W1_i @ W2_i, merge with head into a single (D, head+Σosz) weight and
    cast the MXU operands to bf16 (fold in f32 first for accuracy)."""
    folded = [w1 @ w2 for (w1, w2) in params["tails"]]
    w_comb = jnp.concatenate([params["head_w"]] + folded, axis=1)
    return dict(
        wd=params["wd"].astype(jnp.bfloat16),       # MXU operand
        pos=params["pos"],                          # stays f32 (elementwise path)
        w_comb=w_comb.astype(jnp.bfloat16),         # MXU operand
        oszs=tuple(w2.shape[1] for (_, w2) in params["tails"]),
    )


# ----------------------------------------------------------------------------
# Model.forward (target=None branch)
# ----------------------------------------------------------------------------
def model_forward(prep, latent, seq_dims, cutoffs, n_symbols, target=None,
                  tile_t=None):
    if target is not None:
        # TODO(synk): training branch (adaptive-softmax NLL with target gather)
        # not implemented; only the inference log_probs path is translated.
        raise NotImplementedError("loss branch not implemented")

    T = int(np.prod(seq_dims))
    B, latent_dim = latent.shape
    D = prep["wd"].shape[1]
    assert prep["pos"].shape[0] == T

    shortlist = cutoffs[0]
    n_clusters = len(cutoffs)
    oszs = prep["oszs"]
    V_pad = ((n_symbols + 127) // 128) * 128
    N = T * B

    if tile_t is None:
        if T <= 8:
            tile_t = T
        else:
            # multiple of 8 for (8,128) sublane alignment of the pos / output
            # blocks; grow toward ~2 MiB output block per buffer (well inside
            # v7x's 64 MiB VMEM with double buffering) while keeping >= 2 grid
            # steps for pipelining / megacore sharding.
            tile_t = 8
            while (T % (tile_t * 2) == 0 and T // (tile_t * 2) >= 2 and
                   tile_t * 2 * B * V_pad * 4 <= (2 << 20)):
                tile_t *= 2
    assert T % tile_t == 0 and (tile_t % 8 == 0 or tile_t == T)
    n_tiles = T // tile_t
    tile_n = tile_t * B

    kernel = make_fused_kernel(shortlist, n_clusters, oszs, tile_t, B, D,
                               n_symbols, V_pad)

    out_padded = pl.pallas_call(
        kernel,
        out_shape=jax.ShapeDtypeStruct((N, V_pad), jnp.float32),
        grid=(n_tiles,),
        in_specs=[
            pl.BlockSpec((B, latent_dim), lambda i: (0, 0)),        # resident
            pl.BlockSpec(prep["wd"].shape, lambda i: (0, 0)),       # resident
            pl.BlockSpec((tile_t, D), lambda i: (i, 0)),            # per-tile rows
            pl.BlockSpec(prep["w_comb"].shape, lambda i: (0, 0)),   # resident
        ],
        out_specs=pl.BlockSpec((tile_n, V_pad), lambda i: (i, 0)),
        compiler_params=pltpu.CompilerParams(
            dimension_semantics=("parallel",)),
    )(latent, prep["wd"], prep["pos"], prep["w_comb"])

    # drop pad lanes and restore the (T, B, n_symbols) view of Model.forward
    return out_padded[:, :n_symbols].reshape(T, B, n_symbols)


# ----------------------------------------------------------------------------
# Pure-JAX reference with the same bf16 MXU-operand numerics (validates the
# Pallas kernel against the identical mathematical computation).
# ----------------------------------------------------------------------------
def ref_forward(prep, latent, cutoffs, n_symbols):
    h = jnp.dot(latent.astype(jnp.bfloat16), prep["wd"],
                preferred_element_type=jnp.float32)
    x = jnp.tanh(prep["pos"][:, None, :] + h[None, :, :])           # (T, B, D)
    x2 = x.reshape(-1, x.shape[-1])
    logits = jnp.dot(x2.astype(jnp.bfloat16), prep["w_comb"],
                     preferred_element_type=jnp.float32)
    head_size = cutoffs[0] + len(cutoffs)
    head_lp = jax.nn.log_softmax(logits[:, :head_size], axis=1)
    parts = [head_lp[:, :cutoffs[0]]]
    off = head_size
    for i, osz in enumerate(prep["oszs"]):
        clp = jax.nn.log_softmax(logits[:, off:off + osz], axis=1)
        off += osz
        parts.append(clp + head_lp[:, cutoffs[0] + i:cutoffs[0] + i + 1])
    probs = jnp.concatenate(parts, axis=1)
    return probs.reshape(-1, latent.shape[0], probs.shape[-1])


if __name__ == "__main__":
    # Small, module-consistent hyperparameters.
    n_symbols = 60
    cutoffs = [20, 40]        # -> 2 tail clusters, shortlist of 20
    latent_dim = 16
    d_model = [32, 64]        # StrataVAD d_model list; head uses d_model[-1]
    B = 2
    seq_dims = (16,)          # T = 16  (2 row tiles of 8 -> real grid)
    T = int(np.prod(seq_dims))

    key = jax.random.PRNGKey(0)
    pkey, xkey = jax.random.split(key)
    raw_params = init_params(pkey, n_symbols, cutoffs, latent_dim, d_model[-1], T)
    prep = prepare_params(raw_params)
    latent = jax.random.normal(xkey, (B, latent_dim), jnp.float32)

    out = model_forward(prep, latent, seq_dims, cutoffs, n_symbols)
    out = jax.block_until_ready(out)

    ref = jax.block_until_ready(ref_forward(prep, latent, cutoffs, n_symbols))
    assert out.shape == (T, B, n_symbols), out.shape
    np.testing.assert_allclose(np.asarray(out), np.asarray(ref),
                               rtol=2e-3, atol=2e-3)
    print("KERNEL_OK")
</pallas_src>

<mosaic_0001>
module attributes {stable_mosaic.version = 11 : i64} {
  func.func @kernel(%arg0: i32, %arg1: memref<2x16xf32, #tpu.memory_space<vmem>>, %arg2: memref<16x64xbf16, #tpu.memory_space<vmem>>, %arg3: memref<8x64xf32, #tpu.memory_space<vmem>>, %arg4: memref<64x62xbf16, #tpu.memory_space<vmem>>, %arg5: memref<16x128xf32, #tpu.memory_space<vmem>>) attributes {dimension_semantics = [#tpu.dimension_semantics<parallel>], iteration_bounds = array<i64: 2>, scalar_prefetch = 0 : i64, scratch_operands = 0 : i64, tpu.core_type = #tpu.core_type<tc>, window_params = [{pipeline_mode = #tpu.pipeline_mode<synchronous>, transform_indices = @transform_0, window_bounds = array<i64: 2, 16>}, {pipeline_mode = #tpu.pipeline_mode<synchronous>, transform_indices = @transform_1, window_bounds = array<i64: 16, 64>}, {transform_indices = @transform_2, window_bounds = array<i64: 8, 64>}, {pipeline_mode = #tpu.pipeline_mode<synchronous>, transform_indices = @transform_3, window_bounds = array<i64: 64, 62>}, {transform_indices = @transform_4, window_bounds = array<i64: 16, 128>}]} {
    %c0 = arith.constant 0 : index
    %c0_0 = arith.constant 0 : index
    %0 = vector.load %arg1[%c0, %c0_0] : memref<2x16xf32, #tpu.memory_space<vmem>>, vector<2x16xf32>
    %1 = arith.truncf %0 : vector<2x16xf32> to vector<2x16xbf16>
    %c0_1 = arith.constant 0 : index
    %c0_2 = arith.constant 0 : index
    %2 = vector.load %arg2[%c0_1, %c0_2] : memref<16x64xbf16, #tpu.memory_space<vmem>>, vector<16x64xbf16>
    %cst = arith.constant dense<0.000000e+00> : vector<2x64xf32>
    %3 = tpu.matmul %1, %2, %cst {dimension_numbers = #tpu.dot_dimension_numbers<[1], [0], [0], [1], [0, 0, 1, 1], [], []>} : vector<2x16xbf16>, vector<16x64xbf16>, vector<2x64xf32> -> vector<2x64xf32>
    %c0_3 = arith.constant 0 : index
    %c0_4 = arith.constant 0 : index
    %4 = vector.load %arg3[%c0_3, %c0_4] : memref<8x64xf32, #tpu.memory_space<vmem>>, vector<8x64xf32>
    %5 = vector.shape_cast %4 : vector<8x64xf32> to vector<8x1x64xf32>
    %6 = vector.shape_cast %3 : vector<2x64xf32> to vector<1x2x64xf32>
    %7 = vector.broadcast %5 : vector<8x1x64xf32> to vector<8x2x64xf32>
    %8 = vector.broadcast %6 : vector<1x2x64xf32> to vector<8x2x64xf32>
    %9 = arith.addf %7, %8 : vector<8x2x64xf32>
    %10 = math.tanh %9 : vector<8x2x64xf32>
    %11 = vector.shape_cast %10 : vector<8x2x64xf32> to vector<16x64xf32>
    %12 = arith.truncf %11 : vector<16x64xf32> to vector<16x64xbf16>
    %c0_5 = arith.constant 0 : index
    %c0_6 = arith.constant 0 : index
    %13 = vector.load %arg4[%c0_5, %c0_6] : memref<64x62xbf16, #tpu.memory_space<vmem>>, vector<64x62xbf16>
    %cst_7 = arith.constant dense<0.000000e+00> : vector<16x62xf32>
    %14 = tpu.matmul %12, %13, %cst_7 {dimension_numbers = #tpu.dot_dimension_numbers<[1], [0], [0], [1], [0, 0, 1, 1], [], []>} : vector<16x64xbf16>, vector<64x62xbf16>, vector<16x62xf32> -> vector<16x62xf32>
    %15 = vector.extract_strided_slice %14 {offsets = [0, 0], sizes = [16, 22], strides = [1, 1]} : vector<16x62xf32> to vector<16x22xf32>
    %cst_8 = arith.constant dense<0xFF800000> : vector<16xf32>
    %16 = vector.multi_reduction <maximumf>, %15, %cst_8 [1] : vector<16x22xf32> to vector<16xf32>
    %17 = vector.shape_cast %16 : vector<16xf32> to vector<16x1xf32>
    %18 = vector.broadcast %17 : vector<16x1xf32> to vector<16x22xf32>
    %19 = arith.subf %15, %18 : vector<16x22xf32>
    %20 = math.exp %19 : vector<16x22xf32>
    %cst_9 = arith.constant dense<0.000000e+00> : vector<16xf32>
    %21 = vector.multi_reduction <add>, %20, %cst_9 [1] : vector<16x22xf32> to vector<16xf32>
    %22 = vector.shape_cast %21 : vector<16xf32> to vector<16x1xf32>
    %23 = math.log %22 : vector<16x1xf32>
    %24 = arith.addf %17, %23 : vector<16x1xf32>
    %25 = vector.broadcast %24 : vector<16x1xf32> to vector<16x22xf32>
    %26 = arith.subf %15, %25 : vector<16x22xf32>
    %27 = vector.extract_strided_slice %26 {offsets = [0, 0], sizes = [16, 20], strides = [1, 1]} : vector<16x22xf32> to vector<16x20xf32>
    %28 = vector.extract_strided_slice %14 {offsets = [0, 22], sizes = [16, 20], strides = [1, 1]} : vector<16x62xf32> to vector<16x20xf32>
    %cst_10 = arith.constant dense<0xFF800000> : vector<16xf32>
    %29 = vector.multi_reduction <maximumf>, %28, %cst_10 [1] : vector<16x20xf32> to vector<16xf32>
    %30 = vector.shape_cast %29 : vector<16xf32> to vector<16x1xf32>
    %31 = vector.broadcast %30 : vector<16x1xf32> to vector<16x20xf32>
    %32 = arith.subf %28, %31 : vector<16x20xf32>
    %33 = math.exp %32 : vector<16x20xf32>
    %cst_11 = arith.constant dense<0.000000e+00> : vector<16xf32>
    %34 = vector.multi_reduction <add>, %33, %cst_11 [1] : vector<16x20xf32> to vector<16xf32>
    %35 = vector.shape_cast %34 : vector<16xf32> to vector<16x1xf32>
    %36 = math.log %35 : vector<16x1xf32>
    %37 = arith.addf %30, %36 : vector<16x1xf32>
    %38 = vector.broadcast %37 : vector<16x1xf32> to vector<16x20xf32>
    %39 = arith.subf %28, %38 : vector<16x20xf32>
    %40 = vector.extract_strided_slice %26 {offsets = [0, 20], sizes = [16, 1], strides = [1, 1]} : vector<16x22xf32> to vector<16x1xf32>
    %41 = vector.broadcast %40 : vector<16x1xf32> to vector<16x20xf32>
    %42 = arith.addf %39, %41 : vector<16x20xf32>
    %43 = vector.extract_strided_slice %14 {offsets = [0, 42], sizes = [16, 20], strides = [1, 1]} : vector<16x62xf32> to vector<16x20xf32>
    %cst_12 = arith.constant dense<0xFF800000> : vector<16xf32>
    %44 = vector.multi_reduction <maximumf>, %43, %cst_12 [1] : vector<16x20xf32> to vector<16xf32>
    %45 = vector.shape_cast %44 : vector<16xf32> to vector<16x1xf32>
    %46 = vector.broadcast %45 : vector<16x1xf32> to vector<16x20xf32>
    %47 = arith.subf %43, %46 : vector<16x20xf32>
    %48 = math.exp %47 : vector<16x20xf32>
    %cst_13 = arith.constant dense<0.000000e+00> : vector<16xf32>
    %49 = vector.multi_reduction <add>, %48, %cst_13 [1] : vector<16x20xf32> to vector<16xf32>
    %50 = vector.shape_cast %49 : vector<16xf32> to vector<16x1xf32>
    %51 = math.log %50 : vector<16x1xf32>
    %52 = arith.addf %45, %51 : vector<16x1xf32>
    %53 = vector.broadcast %52 : vector<16x1xf32> to vector<16x20xf32>
    %54 = arith.subf %43, %53 : vector<16x20xf32>
    %55 = vector.extract_strided_slice %26 {offsets = [0, 21], sizes = [16, 1], strides = [1, 1]} : vector<16x22xf32> to vector<16x1xf32>
    %56 = vector.broadcast %55 : vector<16x1xf32> to vector<16x20xf32>
    %57 = arith.addf %54, %56 : vector<16x20xf32>
    %cst_14 = arith.constant 0.000000e+00 : f32
    %58 = vector.broadcast %cst_14 : f32 to vector<16x68xf32>
    %59 = tpu.concatenate %27, %42, %57, %58 in 1 : vector<16x20xf32>, vector<16x20xf32>, vector<16x20xf32>, vector<16x68xf32> -> vector<16x128xf32>
    %c0_15 = arith.constant 0 : index
    %c0_16 = arith.constant 0 : index
    %60 = vector.load %arg5[%c0_15, %c0_16] : memref<16x128xf32, #tpu.memory_space<vmem>>, vector<16x128xf32>
    tpu.vector_store %arg5[%c0_15, %c0_16], %59 {strides = array<i32>} : memref<16x128xf32, #tpu.memory_space<vmem>>, vector<16x128xf32>,
    return
  }
  func.func @transform_0(%arg0: i32) -> (i32, i32) {
    %c0_i32 = arith.constant 0 : i32
    %c0_i32_0 = arith.constant 0 : i32
    %c0_i32_1 = arith.constant 0 : i32
    return %c0_i32, %c0_i32_0 : i32, i32
  }
  func.func @transform_1(%arg0: i32) -> (i32, i32) {
    %c0_i32 = arith.constant 0 : i32
    %c0_i32_0 = arith.constant 0 : i32
    %c0_i32_1 = arith.constant 0 : i32
    return %c0_i32, %c0_i32_0 : i32, i32
  }
  func.func @transform_2(%arg0: i32) -> (i32, i32) {
    %c0_i32 = arith.constant 0 : i32
    %c0_i32_0 = arith.constant 0 : i32
    return %arg0, %c0_i32 : i32, i32
  }
  func.func @transform_3(%arg0: i32) -> (i32, i32) {
    %c0_i32 = arith.constant 0 : i32
    %c0_i32_0 = arith.constant 0 : i32
    %c0_i32_1 = arith.constant 0 : i32
    return %c0_i32, %c0_i32_0 : i32, i32
  }
  func.func @transform_4(%arg0: i32) -> (i32, i32) {
    %c0_i32 = arith.constant 0 : i32
    %c0_i32_0 = arith.constant 0 : i32
    return %arg0, %c0_i32 : i32, i32
  }
}

</mosaic_0001>

<llo_original>
// kernel: tpu_custom_call.1
$region0: #{tpu_custom_call.1}
  #allocation0 [shape = 'u32[]', space=smem, size = 0x4, offset = 0x4, fixed_abs, tag = 'smem constant byte address 0x4 - core index']
  #allocation1 [shape = 'u32[144,128]{1,0:T(1,128)}', space=vmem, size = 0x12000, scoped, tag = 'internal scratch']
  %s0 = inlined_call_operand.hbm [shape: f32[2,16], index: 0, kind: input, shape index: {}]
  %s1 = inlined_call_operand.hbm [shape: bf16[16,64], index: 1, kind: input, shape index: {}]
  %s2 = inlined_call_operand.hbm [shape: f32[16,64], index: 2, kind: input, shape index: {}]
  %s3 = inlined_call_operand.hbm [shape: bf16[64,62], index: 3, kind: input, shape index: {}]
  %s4 = inlined_call_operand.hbm [shape: f32[32,128], index: 4, kind: output, shape index: {}]
  %s5 = sld [smem:[#allocation0]]
  $region65: #{tpu_custom_call.1} parent=0
    _
  %s7 = ssub.s32 1, %s5
  %s8 = scalar_select 0, %s7, %s5
  $region1: #{tpu_custom_call.1} parent=0
    #allocation2 [shape = 'u8[1024]{0}', space=vmem, size = 0x400, scoped, tag = 'input window, operand 0, single buffered']
    #allocation3 [shape = 's32[2]{0}', space=sflag, size = 0x8, scoped, tag = 'scoped memory for tpu_custom_call.1']
    #allocation4 [shape = 's32[2]{0}', space=sflag, size = 0x8, scoped, tag = 'scoped memory for tpu_custom_call.1']
    #allocation5 [shape = 'u8[4096]{0}', space=vmem, size = 0x1000, scoped, tag = 'input window, operand 1, single buffered']
    #allocation6 [shape = 's32[1]{0}', space=sflag, size = 0x4, scoped, tag = 'scoped memory for tpu_custom_call.1']
    #allocation7 [shape = 'u8[8192]{0}', space=vmem, size = 0x2000, scoped, tag = 'input window, operand 2']
    #allocation8 [shape = 'u8[16384]{0}', space=vmem, size = 0x4000, scoped, tag = 'input window, operand 3, single buffered']
    #allocation9 [shape = 'u8[16384]{0}', space=vmem, size = 0x4000, scoped, tag = 'output window, operand 0']
    %9 = vsyncpa [#allocation3], 0
    %10 = vsyncpa [#allocation6], 0
    %11 = vsyncpa [#allocation4], 0
    %s12 = scalar_lea.sflag [#allocation4], 1
    %13 = vsyncpa %s12, 0
    loop: start=0, step=1, limit=4
    $region2: #{tpu_custom_call.1} parent=1 // loop_pre_header
      _
    $region3: #{tpu_custom_call.1} parent=1 // loop_header
      %s15 = sphi 0, %s19
      %p16 = scmp.ge.s32.totalorder %s15, 4
      %s23 = sphi 0, %s23
      %s25 = sphi 0, %s23
      %s26 = sphi 0, %s25
      %s40 = sphi 0, %s26
      %s44 = sphi 0, %s44
      %s46 = sphi 0, %s44
      %s47 = sphi 0, %s46
      %s61 = sphi 0, %s47
      %s67 = sphi 0, %s69
      %s70 = sphi 0, %s67
      %s71 = sphi 0, %s70
      %s87 = sphi 0, %s71
      %s91 = sphi 0, %s91
      %s93 = sphi 0, %s91
      %s94 = sphi 0, %s93
      %s108 = sphi 0, %s94
      %s114 = sphi 0, %s116
      %s117 = sphi 0, %s114
      %s118 = sphi 0, %s117
      %s134 = sphi 0, %s118
    $region4: #{tpu_custom_call.1} parent=1 // loop_header_branch
      %18 = sbr.rel (%p16) target = $region8
    $region5: #{tpu_custom_call.1} parent=1 // loop_body
      %s20 = ssub.s32 %s15, 1
      %s21 = ssub.s32 %s15, 2
      %s22 = sadd.s32 %s15, 1
      %s24 = sadd.s32 %s23, 1
      %p27 = scmp.eq.s32.totalorder %s15, 1
      %p28 = scmp.ne.s32.totalorder %s23, %s25
      %p29 = scmp.eq.s32.totalorder %s15, 0
      %p30 = por %p28, %p29
      %p31 = scmp.ne.s32.totalorder %s23, %s25
      %p32 = scmp.eq.s32.totalorder %s20, 1
      %p33 = por %p31, %p32
      %p34 = scmp.ne.s32.totalorder %s25, %s26
      %p35 = scmp.eq.s32.totalorder %s20, 0
      %p36 = por %p34, %p35
      %p37 = scmp.ne.s32.totalorder %s25, %s26
      %p38 = scmp.eq.s32.totalorder %s21, 1
      %p39 = por %p37, %p38
      %p41 = scmp.ne.s32.totalorder %s26, %s40
      %p42 = scmp.eq.s32.totalorder %s21, 0
      %p43 = por %p41, %p42
      %s45 = sadd.s32 %s44, 1
      %p48 = scmp.eq.s32.totalorder %s15, 1
      %p49 = scmp.ne.s32.totalorder %s44, %s46
      %p50 = scmp.eq.s32.totalorder %s15, 0
      %p51 = por %p49, %p50
      %p52 = scmp.ne.s32.totalorder %s44, %s46
      %p53 = scmp.eq.s32.totalorder %s20, 1
      %p54 = por %p52, %p53
      %p55 = scmp.ne.s32.totalorder %s46, %s47
      %p56 = scmp.eq.s32.totalorder %s20, 0
      %p57 = por %p55, %p56
      %p58 = scmp.ne.s32.totalorder %s46, %s47
      %p59 = scmp.eq.s32.totalorder %s21, 1
      %p60 = por %p58, %p59
      %p62 = scmp.ne.s32.totalorder %s47, %s61
      %p63 = scmp.eq.s32.totalorder %s21, 0
      %p64 = por %p62, %p63
      %s65 = ssub.s32 %s15, %s22
      %p66 = scmp.eq.s32.totalorder %s65, 0
      %s68 = sadd.s32 %s67, 1
      %s69 = scalar_select %p66, %s67, %s68
      %p72 = pneg %p66
      %p73 = scmp.eq.s32.totalorder %s15, 1
      %p74 = por %p72, %p73
      %p75 = scmp.ne.s32.totalorder %s67, %s70
      %p76 = scmp.eq.s32.totalorder %s15, 0
      %p77 = por %p75, %p76
      %p78 = scmp.ne.s32.totalorder %s67, %s70
      %p79 = scmp.eq.s32.totalorder %s20, 1
      %p80 = por %p78, %p79
      %p81 = scmp.ne.s32.totalorder %s70, %s71
      %p82 = scmp.eq.s32.totalorder %s20, 0
      %p83 = por %p81, %p82
      %p84 = scmp.ne.s32.totalorder %s70, %s71
      %p85 = scmp.eq.s32.totalorder %s21, 1
      %p86 = por %p84, %p85
      %p88 = scmp.ne.s32.totalorder %s71, %s87
      %p89 = scmp.eq.s32.totalorder %s21, 0
      %p90 = por %p88, %p89
      %s92 = sadd.s32 %s91, 1
      %p95 = scmp.eq.s32.totalorder %s15, 1
      %p96 = scmp.ne.s32.totalorder %s91, %s93
      %p97 = scmp.eq.s32.totalorder %s15, 0
      %p98 = por %p96, %p97
      %p99 = scmp.ne.s32.totalorder %s91, %s93
      %p100 = scmp.eq.s32.totalorder %s20, 1
      %p101 = por %p99, %p100
      %p102 = scmp.ne.s32.totalorder %s93, %s94
      %p103 = scmp.eq.s32.totalorder %s20, 0
      %p104 = por %p102, %p103
      %p105 = scmp.ne.s32.totalorder %s93, %s94
      %p106 = scmp.eq.s32.totalorder %s21, 1
      %p107 = por %p105, %p106
      %p109 = scmp.ne.s32.totalorder %s94, %s108
      %p110 = scmp.eq.s32.totalorder %s21, 0
      %p111 = por %p109, %p110
      %s112 = ssub.s32 %s15, %s22
      %p113 = scmp.eq.s32.totalorder %s112, 0
      %s115 = sadd.s32 %s114, 1
      %s116 = scalar_select %p113, %s114, %s115
      %p119 = pneg %p113
      %p120 = scmp.eq.s32.totalorder %s15, 1
      %p121 = por %p119, %p120
      %p122 = scmp.ne.s32.totalorder %s114, %s117
      %p123 = scmp.eq.s32.totalorder %s15, 0
      %p124 = por %p122, %p123
      %p125 = scmp.ne.s32.totalorder %s114, %s117
      %p126 = scmp.eq.s32.totalorder %s20, 1
      %p127 = por %p125, %p126
      %p128 = scmp.ne.s32.totalorder %s117, %s118
      %p129 = scmp.eq.s32.totalorder %s20, 0
      %p130 = por %p128, %p129
      %p131 = scmp.ne.s32.totalorder %s117, %s118
      %p132 = scmp.eq.s32.totalorder %s21, 1
      %p133 = por %p131, %p132
      %p135 = scmp.ne.s32.totalorder %s118, %s134
      %p136 = scmp.eq.s32.totalorder %s21, 0
      %p137 = por %p135, %p136
      %p138 = scmp.le.s32.totalorder 1, %s15
      %p139 = scmp.lt.s32.totalorder %s15, 3
      %p140 = pnand %p138, %p139
      %p141 = pneg %p140
      // Predicated region
      $region9: #{tpu_custom_call.1} parent=5 // pred_check
        _
      $region10: #{tpu_custom_call.1} parent=5 // pred_check_branch
        %143 = sbr.rel (%p140) target = $region12
      $region11: #{tpu_custom_call.1} parent=5 // pred_region
        %s144 = ssub.s32 %s15, 1
        // Predicated region
        $region13: #{tpu_custom_call.1} parent=11 // pred_check
          %p145 = pneg %p36
        $region14: #{tpu_custom_call.1} parent=11 // pred_check_branch
          %147 = sbr.rel (%p145) target = $region16
        $region15: #{tpu_custom_call.1} parent=11 // pred_region
          %s149 = ssub.s32 32, 32
          %150 = vsyncadd [#allocation3], %s149
          %s152 = sshll.u32 [#allocation2], 4
          %s153 = int_to_ptr.vmem [resolvable:$true] %s152
          %155 = dma.hbm_to_vmem [thread:$0]  %s0, 32, %s153, [#allocation3]
        $region16: #{tpu_custom_call.1} parent=11 // pred_fallthru
          _
        // Predicated region
        $region17: #{tpu_custom_call.1} parent=11 // pred_check
          %p156 = pneg %p57
        $region18: #{tpu_custom_call.1} parent=11 // pred_check_branch
          %158 = sbr.rel (%p156) target = $region20
        $region19: #{tpu_custom_call.1} parent=11 // pred_region
          %s160 = ssub.s32 128, 128
          %161 = vsyncadd [#allocation6], %s160
          %s162 = sshll.u32 [#allocation5], 4
          %s163 = int_to_ptr.vmem [resolvable:$true] %s162
          %168 = dma.hbm_to_vmem [thread:$0]  %s1, 128, %s163, [#allocation6], 64, 64, 4
        $region20: #{tpu_custom_call.1} parent=11 // pred_fallthru
          _
        // Predicated region
        $region21: #{tpu_custom_call.1} parent=11 // pred_check
          %p169 = pneg %p104
        $region22: #{tpu_custom_call.1} parent=11 // pred_check_branch
          %171 = sbr.rel (%p169) target = $region24
        $region23: #{tpu_custom_call.1} parent=11 // pred_region
          %s173 = ssub.s32 512, 512
          %174 = vsyncadd [#allocation6], %s173
          %s175 = sshll.u32 [#allocation8], 4
          %s176 = int_to_ptr.vmem [resolvable:$true] %s175
          %181 = dma.hbm_to_vmem [thread:$0]  %s3, 512, %s176, [#allocation6], 64, 64, 4
        $region24: #{tpu_custom_call.1} parent=11 // pred_fallthru
          _
      $region12: #{tpu_custom_call.1} parent=5 // pred_fallthru
        _
      %p182 = scmp.lt.s32.totalorder %s15, 2
      // Predicated region
      $region25: #{tpu_custom_call.1} parent=5 // pred_check
        %p183 = pneg %p182
      $region26: #{tpu_custom_call.1} parent=5 // pred_check_branch
        %185 = sbr.rel (%p183) target = $region28
      $region27: #{tpu_custom_call.1} parent=5 // pred_region
        // Predicated region
        $region29: #{tpu_custom_call.1} parent=27 // pred_check
          %p186 = pneg %p77
        $region30: #{tpu_custom_call.1} parent=27 // pred_check_branch
          %188 = sbr.rel (%p186) target = $region32
        $region31: #{tpu_custom_call.1} parent=27 // pred_region
          %s189 = sand.u32 %s15, 1
          %s190 = scalar_lea.sflag [#allocation3], %s189
          %s191 = sand.u32 %s67, 1
          %s192 = smul.addr %s191, 8
          %s193 = scalar_lea.vmem [#allocation7], %s192
          %s195 = ssub.s32 128, 128
          %196 = vsyncadd %s190, %s195
          %s197 = smul.addr %s15, 128
          %s198 = scalar_lea.hbm %s2, %s197
          %s200 = sshll.u32 %s193, 4
          %s201 = int_to_ptr.vmem [resolvable:$true] %s200
          %203 = dma.hbm_to_vmem [thread:$0]  %s198, 128, %s201, %s190
        $region32: #{tpu_custom_call.1} parent=27 // pred_fallthru
          _
      $region28: #{tpu_custom_call.1} parent=5 // pred_fallthru
        _
      %p204 = scmp.le.s32.totalorder 1, %s15
      %p205 = scmp.lt.s32.totalorder %s15, 3
      %p206 = pnand %p204, %p205
      %p207 = pneg %p206
      // Predicated region
      $region33: #{tpu_custom_call.1} parent=5 // pred_check
        _
      $region34: #{tpu_custom_call.1} parent=5 // pred_check_branch
        %209 = sbr.rel (%p206) target = $region36
      $region35: #{tpu_custom_call.1} parent=5 // pred_region
        %s210 = ssub.s32 %s15, 1
        // Predicated region
        $region37: #{tpu_custom_call.1} parent=35 // pred_check
          %p211 = pneg %p36
        $region38: #{tpu_custom_call.1} parent=35 // pred_check_branch
          %213 = sbr.rel (%p211) target = $region40
        $region39: #{tpu_custom_call.1} parent=35 // pred_region
          %214 = dma.done [#allocation3], 32
        $region40: #{tpu_custom_call.1} parent=35 // pred_fallthru
          _
        // Predicated region
        $region41: #{tpu_custom_call.1} parent=35 // pred_check
          %p215 = pneg %p57
        $region42: #{tpu_custom_call.1} parent=35 // pred_check_branch
          %217 = sbr.rel (%p215) target = $region44
        $region43: #{tpu_custom_call.1} parent=35 // pred_region
          %218 = dma.done [#allocation6], 128
        $region44: #{tpu_custom_call.1} parent=35 // pred_fallthru
          _
        %s219 = sand.u32 %s20, 1
        %s220 = scalar_lea.sflag [#allocation3], %s219
        %s221 = sand.u32 %s70, 1
        %s222 = smul.addr %s221, 8
        %s223 = scalar_lea.vmem [#allocation7], %s222
        // Predicated region
        $region45: #{tpu_custom_call.1} parent=35 // pred_check
          %p224 = pneg %p83
        $region46: #{tpu_custom_call.1} parent=35 // pred_check_branch
          %226 = sbr.rel (%p224) target = $region48
        $region47: #{tpu_custom_call.1} parent=35 // pred_region
          %227 = dma.done %s220, 128
        $region48: #{tpu_custom_call.1} parent=35 // pred_fallthru
          _
        // Predicated region
        $region49: #{tpu_custom_call.1} parent=35 // pred_check
          %p228 = pneg %p104
        $region50: #{tpu_custom_call.1} parent=35 // pred_check_branch
          %230 = sbr.rel (%p228) target = $region52
        $region51: #{tpu_custom_call.1} parent=35 // pred_region
          %231 = dma.done [#allocation6], 512
        $region52: #{tpu_custom_call.1} parent=35 // pred_fallthru
          _
        %p232 = pneg %p36
        %p233 = pneg %p33
        %p234 = pneg %p57
        %p235 = pneg %p54
        %s236 = sand.u32 %s20, 1
        %s237 = scalar_lea.sflag [#allocation3], %s236
        %s238 = sand.u32 %s70, 1
        %s239 = smul.addr %s238, 8
        %s240 = scalar_lea.vmem [#allocation7], %s239
        %p241 = pneg %p83
        %p242 = pneg %p80
        %p243 = pneg %p104
        %p244 = pneg %p101
        %p245 = pneg %p130
        %p246 = pneg %p127
        %s247 = sand.u32 %s117, 1
        %s248 = scalar_lea.sflag [#allocation4], %s247
        %s249 = sand.u32 %s117, 1
        %s250 = smul.addr %s249, 16
        %s251 = scalar_lea.vmem [#allocation9], %s250
        %s252 = smul.u32 2, %s20
        %v254 = vld [vmem:[#allocation2] sm:$0x3]
        %v255 = vpack.c.bf16 %v254, %v254
        %v256 = vld [vmem:[#allocation5] sm:$0xf]
        %v257 = vld [vmem:[#allocation5 + $0x4] sm:$0xf]
        %v260 = vunpack.c.l.b16 %v256
        %v261 = vunpack.c.l.b16 %v257
        %v262 = vpack.c.b16 %v261, %v260
        %vm264 = vcmask 130048
        %v266 = vsel %vm264, %v255, 0
        %268 = vmatprep.subr.bf16.mxu0 0
        %269 = vmatpush1.bf16.msra.mxu0 0
        %270 = vmatprep.subr.bf16.mxu0 0
        %271 = vmatpush1.bf16.msra.mxu0 0
        %272 = vmatprep.subr.bf16.mxu0 0
        %273 = vmatpush1.bf16.msra.mxu0 0
        %274 = vmatprep.subr.bf16.mxu0 0
        %275 = vmatpush1.bf16.msra.mxu0 0
        %276 = vmatprep.subr.bf16.mxu0 0
        %277 = vmatpush1.bf16.msra.mxu0 0
        %278 = vmatprep.subr.bf16.mxu0 0
        %279 = vmatpush1.bf16.msra.mxu0 0
        %280 = vmatprep.subr.bf16.mxu0 0
        %281 = vmatpush1.bf16.msra.mxu0 0
        %282 = vmatprep.subr.bf16.mxu0 0
        %283 = vmatpush1.bf16.msra.mxu0 %v262
        %284 = vmatprep.subr.bf16.mxu0 0
        %285 = vmatpush2.bf16.msra.mxu0 0
        %286 = vmatprep.subr.bf16.mxu0 0
        %287 = vmatpush2.bf16.msra.mxu0 0
        %288 = vmatprep.subr.bf16.mxu0 0
        %289 = vmatpush2.bf16.msra.mxu0 0
        %290 = vmatprep.subr.bf16.mxu0 0
        %291 = vmatpush2.bf16.msra.mxu0 0
        %292 = vmatprep.subr.bf16.mxu0 0
        %293 = vmatpush2.bf16.msra.mxu0 0
        %294 = vmatprep.subr.bf16.mxu0 0
        %295 = vmatpush2.bf16.msra.mxu0 0
        %296 = vmatprep.subr.bf16.mxu0 0
        %297 = vmatpush2.bf16.msra.mxu0 0
        %298 = vmatprep.subr.bf16.mxu0 0
        %299 = vmatpush2.bf16.msra.mxu0 0
        %300 = vmatprep.mubr.bf16.mxu0 0
        %301 = vmatmul.mubr.bf16.gmra.mxu0 %v266
        %v302 = vpop.f32.mrf.mxu0
        %v303 = vadd.f32 0.0, %v302
        %v304 = vpop.f32.mrf.mxu0
        %v305 = vpop.f32.mrf.mxu0
        %v306 = vpop.f32.mrf.mxu0
        %307 = vdwg.mxu0
        %v308 = vld [vmem:[%s223] sm:$0xff]
        %v310 = vcombine.high %v308, %v308
        %v312 = vunpack.c.l.s4 1966171168
        %v313 = vunpack.c.0.s8 %v312
        %v314 = vlaneseq
        %v315 = vshrl.u32 %v314, 7
        %v316 = vsub.s32 %v313, %v315
        %v317 = vrot.slane %v308, %v316
        %v319 = vunpack.c.l.s4 1966171168
        %v320 = vunpack.c.0.s8 %v319
        %v321 = vlaneseq
        %v322 = vshrl.u32 %v321, 7
        %v323 = vsub.s32 %v320, %v322
        %v324 = vrot.slane %v310, %v323
        %v325 = vcombine.high %v317, %v317
        %v326 = vcombine.high %v324, %v324
        %v328 = vunpack.c.l.s4 1966171168
        %v329 = vunpack.c.0.s8 %v328
        %v330 = vlaneseq
        %v331 = vshrl.u32 %v330, 7
        %v332 = vsub.s32 %v329, %v331
        %v333 = vrot.slane %v317, %v332
        %v335 = vunpack.c.l.s4 1966171168
        %v336 = vunpack.c.0.s8 %v335
        %v337 = vlaneseq
        %v338 = vshrl.u32 %v337, 7
        %v339 = vsub.s32 %v336, %v338
        %v340 = vrot.slane %v324, %v339
        %v342 = vunpack.c.l.s4 1966171168
        %v343 = vunpack.c.0.s8 %v342
        %v344 = vlaneseq
        %v345 = vshrl.u32 %v344, 7
        %v346 = vsub.s32 %v343, %v345
        %v347 = vrot.slane %v325, %v346
        %v349 = vunpack.c.l.s4 1966171168
        %v350 = vunpack.c.0.s8 %v349
        %v351 = vlaneseq
        %v352 = vshrl.u32 %v351, 7
        %v353 = vsub.s32 %v350, %v352
        %v354 = vrot.slane %v326, %v353
        %v355 = vcombine.high %v333, %v333
        %v356 = vcombine.high %v340, %v340
        %v357 = vcombine.high %v347, %v347
        %v358 = vcombine.high %v354, %v354
        %v359 = vlaneseq
        %v360 = vshrl.u32 %v359, 7
        %v361 = vsub.s32 0, %v360
        %v362 = vrot.slane %v333, %v361
        %v363 = vlaneseq
        %v364 = vshrl.u32 %v363, 7
        %v365 = vsub.s32 0, %v364
        %v366 = vrot.slane %v347, %v365
        %v367 = vlaneseq
        %v368 = vshrl.u32 %v367, 7
        %v369 = vsub.s32 0, %v368
        %v370 = vrot.slane %v355, %v369
        %v371 = vlaneseq
        %v372 = vshrl.u32 %v371, 7
        %v373 = vsub.s32 0, %v372
        %v374 = vrot.slane %v357, %v373
        %v375 = vlaneseq
        %v376 = vshrl.u32 %v375, 7
        %v377 = vsub.s32 0, %v376
        %v378 = vrot.slane %v340, %v377
        %v379 = vlaneseq
        %v380 = vshrl.u32 %v379, 7
        %v381 = vsub.s32 0, %v380
        %v382 = vrot.slane %v354, %v381
        %v383 = vlaneseq
        %v384 = vshrl.u32 %v383, 7
        %v385 = vsub.s32 0, %v384
        %v386 = vrot.slane %v356, %v385
        %v387 = vlaneseq
        %v388 = vshrl.u32 %v387, 7
        %v389 = vsub.s32 0, %v388
        %v390 = vrot.slane %v358, %v389
        %v399 = vadd.f32 %v362, %v303
        %v400 = vadd.f32 %v366, %v303
        %v401 = vadd.f32 %v370, %v303
        %v402 = vadd.f32 %v374, %v303
        %v403 = vadd.f32 %v378, %v303
        %v404 = vadd.f32 %v382, %v303
        %v405 = vadd.f32 %v386, %v303
        %v406 = vadd.f32 %v390, %v303
        %v407 = vtanh.pop %v399
        %v408 = vtanh.pop %v400
        %v409 = vtanh.pop %v401
        %v410 = vtanh.pop %v402
        %v411 = vtanh.pop %v403
        %v412 = vtanh.pop %v404
        %v413 = vtanh.pop %v405
        %v414 = vtanh.pop %v406
        %v423 = vcombine.low %v407, %v408
        %v424 = vcombine.low %v409, %v410
        %v426 = vunpack.c.l.s4 1983009808
        %v427 = vunpack.c.0.s8 %v426
        %v428 = vlaneseq
        %v429 = vshrl.u32 %v428, 7
        %v430 = vsub.s32 %v427, %v429
        %v431 = vrot.slane %v423, %v430
        %v433 = vunpack.c.l.s4 1983009808
        %v434 = vunpack.c.0.s8 %v433
        %v435 = vlaneseq
        %v436 = vshrl.u32 %v435, 7
        %v437 = vsub.s32 %v434, %v436
        %v438 = vrot.slane %v424, %v437
        %v439 = vcombine.low %v431, %v438
        %v440 = vcombine.low %v411, %v412
        %v441 = vcombine.low %v413, %v414
        %v443 = vunpack.c.l.s4 1983009808
        %v444 = vunpack.c.0.s8 %v443
        %v445 = vlaneseq
        %v446 = vshrl.u32 %v445, 7
        %v447 = vsub.s32 %v444, %v446
        %v448 = vrot.slane %v440, %v447
        %v450 = vunpack.c.l.s4 1983009808
        %v451 = vunpack.c.0.s8 %v450
        %v452 = vlaneseq
        %v453 = vshrl.u32 %v452, 7
        %v454 = vsub.s32 %v451, %v453
        %v455 = vrot.slane %v441, %v454
        %v456 = vcombine.low %v448, %v455
        %v459 = vpack.c.bf16 %v456, %v439
        %v460 = vld [vmem:[#allocation8] sm:$0xf]
        %v461 = vld [vmem:[#allocation8 + $0x4] sm:$0xf]
        %v462 = vld [vmem:[#allocation8 + $0x8] sm:$0xf]
        %v463 = vld [vmem:[#allocation8 + $0xc] sm:$0xf]
        %v464 = vld [vmem:[#allocation8 + $0x10] sm:$0xf]
        %v465 = vld [vmem:[#allocation8 + $0x14] sm:$0xf]
        %v466 = vld [vmem:[#allocation8 + $0x18] sm:$0xf]
        %v467 = vld [vmem:[#allocation8 + $0x1c] sm:$0xf]
        %v476 = vunpack.c.l.b16 %v460
        %v477 = vunpack.c.l.b16 %v461
        %v478 = vunpack.c.l.b16 %v462
        %v479 = vunpack.c.l.b16 %v463
        %v480 = vunpack.c.l.b16 %v464
        %v481 = vunpack.c.l.b16 %v465
        %v482 = vunpack.c.l.b16 %v466
        %v483 = vunpack.c.l.b16 %v467
        %v484 = vpack.c.b16 %v477, %v476
        %v485 = vpack.c.b16 %v479, %v478
        %v486 = vpack.c.b16 %v481, %v480
        %v487 = vpack.c.b16 %v483, %v482
        %vm492 = vcmask 523264
        %v494 = vsel %vm492, %v459, 0
        %496 = vmatprep.subr.bf16.mxu0 0
        %497 = vmatpush1.bf16.msra.mxu0 0
        %498 = vmatprep.subr.bf16.mxu0 0
        %499 = vmatpush1.bf16.msra.mxu0 0
        %500 = vmatprep.subr.bf16.mxu0 0
        %501 = vmatpush1.bf16.msra.mxu0 0
        %502 = vmatprep.subr.bf16.mxu0 0
        %503 = vmatpush1.bf16.msra.mxu0 0
        %504 = vmatprep.subr.bf16.mxu0 0
        %505 = vmatpush1.bf16.msra.mxu0 %v487
        %506 = vmatprep.subr.bf16.mxu0 0
        %507 = vmatpush1.bf16.msra.mxu0 %v486
        %508 = vmatprep.subr.bf16.mxu0 0
        %509 = vmatpush1.bf16.msra.mxu0 %v485
        %510 = vmatprep.subr.bf16.mxu0 0
        %511 = vmatpush1.bf16.msra.mxu0 %v484
        %512 = vmatprep.subr.bf16.mxu0 0
        %513 = vmatpush2.bf16.msra.mxu0 0
        %514 = vmatprep.subr.bf16.mxu0 0
        %515 = vmatpush2.bf16.msra.mxu0 0
        %516 = vmatprep.subr.bf16.mxu0 0
        %517 = vmatpush2.bf16.msra.mxu0 0
        %518 = vmatprep.subr.bf16.mxu0 0
        %519 = vmatpush2.bf16.msra.mxu0 0
        %520 = vmatprep.subr.bf16.mxu0 0
        %521 = vmatpush2.bf16.msra.mxu0 0
        %522 = vmatprep.subr.bf16.mxu0 0
        %523 = vmatpush2.bf16.msra.mxu0 0
        %524 = vmatprep.subr.bf16.mxu0 0
        %525 = vmatpush2.bf16.msra.mxu0 0
        %526 = vmatprep.subr.bf16.mxu0 0
        %527 = vmatpush2.bf16.msra.mxu0 0
        %528 = vmatprep.mubr.bf16.mxu0 0
        %529 = vmatmul.mubr.bf16.gmra.mxu0 %v494
        %v530 = vpop.f32.mrf.mxu0
        %v531 = vadd.f32 0.0, %v530
        %v532 = vpop.f32.mrf.mxu0
        %v533 = vpop.f32.mrf.mxu0
        %v534 = vadd.f32 0.0, %v533
        %v535 = vpop.f32.mrf.mxu0
        %536 = vdwg.mxu0
        %vm537 = vcmask 179200
        %v538 = vsel %vm537, %v531, -inf
        %539 = vmax.xlane.f32.xlu0 %v538
        %v540 = vpop.xlane.xlu0 %539
        %v541 = vsel %vm537, %v534, -inf
        %542 = vmax.xlane.f32.xlu0 %v541
        %v543 = vpop.xlane.xlu0 %542
        %v544 = vsub.f32 %v531, %v540
        %v545 = vsub.f32 %v534, %v543
        %v546 = vmul.f32 %v544, 1.442695
        %v547 = vpow.pop %v546
        %v548 = vmul.f32 %v545, 1.442695
        %v549 = vpow.pop %v548
        %v550 = vsel %vm537, %v547, 0.0
        %551 = vadd.xlane.f32.xlu0 %v550
        %v552 = vpop.xlane.xlu0 %551
        %v553 = vsel %vm537, %v549, 0.0
        %554 = vadd.xlane.f32.xlu0 %v553
        %v555 = vpop.xlane.xlu0 %554
        %v556 = vlog2.pop %v552
        %v557 = vmul.f32 %v556, 0.6931472
        %v558 = vlog2.pop %v555
        %v559 = vmul.f32 %v558, 0.6931472
        %v560 = vadd.f32 %v540, %v557
        %v561 = vadd.f32 %v543, %v559
        %v562 = vsub.f32 %v531, %v560
        %v563 = vsub.f32 %v534, %v561
        %vm564 = vcmask 343216
        %v565 = vsel %vm564, %v531, -inf
        %566 = vmax.xlane.f32.xlu0 %v565
        %v567 = vpop.xlane.xlu0 %566
        %v568 = vsel %vm564, %v534, -inf
        %569 = vmax.xlane.f32.xlu0 %v568
        %v570 = vpop.xlane.xlu0 %569
        %v571 = vsub.f32 %v531, %v567
        %v572 = vsub.f32 %v534, %v570
        %v573 = vmul.f32 %v571, 1.442695
        %v574 = vpow.pop %v573
        %v575 = vmul.f32 %v572, 1.442695
        %v576 = vpow.pop %v575
        %579 = vrot.lane.b32.xlu0 %v574, 106
        %v580 = vpop.permute.xlu0 %579
        %581 = vrot.lane.b32.xlu0 %v576, 106
        %v582 = vpop.permute.xlu0 %581
        %vm585 = vcmask 162816
        %v586 = vsel %vm585, %v580, 0.0
        %587 = vadd.xlane.f32.xlu0 %v586
        %v588 = vpop.xlane.xlu0 %587
        %v589 = vsel %vm585, %v582, 0.0
        %590 = vadd.xlane.f32.xlu0 %v589
        %v591 = vpop.xlane.xlu0 %590
        %v592 = vlog2.pop %v588
        %v593 = vmul.f32 %v592, 0.6931472
        %v594 = vlog2.pop %v591
        %v595 = vmul.f32 %v594, 0.6931472
        %v596 = vadd.f32 %v567, %v593
        %v597 = vadd.f32 %v570, %v595
        %v598 = vsub.f32 %v531, %v596
        %v599 = vsub.f32 %v534, %v597
        %601 = vset.pattern.permute.xlu0 20
        %602 = vperm.xlu0 %601, %v562
        %v603 = vpop.permute.xlu0 %602
        %606 = vset.pattern.permute.xlu0 20
        %607 = vperm.xlu0 %606, %v563
        %v608 = vpop.permute.xlu0 %607
        %v610 = vadd.f32 %v598, %v603
        %v611 = vadd.f32 %v599, %v608
        %vm612 = vcmask 507216
        %v613 = vsel %vm612, %v531, -inf
        %614 = vmax.xlane.f32.xlu0 %v613
        %v615 = vpop.xlane.xlu0 %614
        %v616 = vsel %vm612, %v534, -inf
        %617 = vmax.xlane.f32.xlu0 %v616
        %v618 = vpop.xlane.xlu0 %617
        %v619 = vsub.f32 %v531, %v615
        %v620 = vsub.f32 %v534, %v618
        %v621 = vmul.f32 %v619, 1.442695
        %v622 = vpow.pop %v621
        %v623 = vmul.f32 %v620, 1.442695
        %v624 = vpow.pop %v623
        %627 = vrot.lane.b32.xlu0 %v622, 86
        %v628 = vpop.permute.xlu0 %627
        %629 = vrot.lane.b32.xlu0 %v624, 86
        %v630 = vpop.permute.xlu0 %629
        %v633 = vsel %vm585, %v628, 0.0
        %634 = vadd.xlane.f32.xlu0 %v633
        %v635 = vpop.xlane.xlu0 %634
        %v636 = vsel %vm585, %v630, 0.0
        %637 = vadd.xlane.f32.xlu0 %v636
        %v638 = vpop.xlane.xlu0 %637
        %v639 = vlog2.pop %v635
        %v640 = vmul.f32 %v639, 0.6931472
        %v641 = vlog2.pop %v638
        %v642 = vmul.f32 %v641, 0.6931472
        %v643 = vadd.f32 %v615, %v640
        %v644 = vadd.f32 %v618, %v642
        %v645 = vsub.f32 %v531, %v643
        %v646 = vsub.f32 %v534, %v644
        %647 = vset.pattern.permute.xlu0 21
        %648 = vperm.xlu0 %647, %v562
        %v649 = vpop.permute.xlu0 %648
        %651 = vset.pattern.permute.xlu0 21
        %652 = vperm.xlu0 %651, %v563
        %v653 = vpop.permute.xlu0 %652
        %v655 = vadd.f32 %v645, %v649
        %v656 = vadd.f32 %v646, %v653
        %659 = vrot.lane.b32.xlu0 %v610, 126
        %v660 = vpop.permute.xlu0 %659
        %661 = vrot.lane.b32.xlu0 %v611, 126
        %v662 = vpop.permute.xlu0 %661
        %667 = vrot.lane.b32.xlu0 %v655, 126
        %v668 = vpop.permute.xlu0 %667
        %669 = vrot.lane.b32.xlu0 %v656, 126
        %v670 = vpop.permute.xlu0 %669
        %v673 = vsel %vm585, %v562, %v660
        %v674 = vsel %vm585, %v563, %v662
        %vm675 = vcmask 326656
        %v676 = vsel %vm675, %v673, %v668
        %v677 = vsel %vm675, %v674, %v670
        %vm678 = vcmask 490496
        %v679 = vsel %vm678, %v676, 0.0
        %v680 = vsel %vm678, %v677, 0.0
        %681 = vst [vmem:[%s251] sm:$0xff] %v679
        %682 = vst [vmem:[%s251 + $0x8] sm:$0xff] %v680
        %s683 = sand.u32 %s117, 1
        %s684 = scalar_lea.sflag [#allocation4], %s683
        %s685 = sand.u32 %s117, 1
        %s686 = smul.addr %s685, 16
        %s687 = scalar_lea.vmem [#allocation9], %s686
        // Predicated region
        $region53: #{tpu_custom_call.1} parent=35 // pred_check
          %p688 = pneg %p127
        $region54: #{tpu_custom_call.1} parent=35 // pred_check_branch
          %690 = sbr.rel (%p688) target = $region56
        $region55: #{tpu_custom_call.1} parent=35 // pred_region
          %s691 = smul.u32 2, %s20
          %s693 = ssub.s32 256, 256
          %694 = vsyncadd %s684, %s693
          %s695 = smul.addr %s691, 128
          %s696 = scalar_lea.hbm %s4, %s695
          %s697 = sshll.u32 %s687, 4
          %s698 = int_to_ptr.vmem [resolvable:$true] %s697
          %703 = dma.vmem_to_hbm [thread:$0]  %s698, 256, %s696, %s684, 128, 128, 8
        $region56: #{tpu_custom_call.1} parent=35 // pred_fallthru
          _
      $region36: #{tpu_custom_call.1} parent=5 // pred_fallthru
        _
      %p704 = scmp.le.s32.totalorder 2, %s15
      // Predicated region
      $region57: #{tpu_custom_call.1} parent=5 // pred_check
        %p705 = pneg %p704
      $region58: #{tpu_custom_call.1} parent=5 // pred_check_branch
        %707 = sbr.rel (%p705) target = $region60
      $region59: #{tpu_custom_call.1} parent=5 // pred_region
        %s708 = ssub.s32 %s15, 2
        // Predicated region
        $region61: #{tpu_custom_call.1} parent=59 // pred_check
          %p709 = pneg %p133
        $region62: #{tpu_custom_call.1} parent=59 // pred_check_branch
          %711 = sbr.rel (%p709) target = $region64
        $region63: #{tpu_custom_call.1} parent=59 // pred_region
          %s712 = sand.u32 %s118, 1
          %s713 = scalar_lea.sflag [#allocation4], %s712
          %s714 = sand.u32 %s118, 1
          %s715 = smul.addr %s714, 16
          %s716 = scalar_lea.vmem [#allocation9], %s715
          %717 = dma.done %s713, 256
        $region64: #{tpu_custom_call.1} parent=59 // pred_fallthru
          _
      $region60: #{tpu_custom_call.1} parent=5 // pred_fallthru
        _
    $region6: #{tpu_custom_call.1} parent=1 // loop_footer
      %s19 = sadd.s32 1, %s15
    $region7: #{tpu_custom_call.1} parent=1 // loop_footer_branch
      %14 = sbr.rel target = $region3
    $region8: #{tpu_custom_call.1} parent=1 // loop_exit
      _
    %718 = vsyncpa [#allocation3], 1
    %s719 = scalar_lea.sflag [#allocation3], 1
    %720 = vsyncpa %s719, 1
    %721 = vsyncpa [#allocation6], 1
    %722 = vsyncpa [#allocation4], 1
    %s723 = scalar_lea.sflag [#allocation4], 1
    %724 = vsyncpa %s723, 1

</llo_original>
